<compile_context>
chip_gen: v7x
topology: tpu7x:2x2x1
jax: 0.10.0
libtpu: 0.0.40
codegen_flags: <defaults>
</compile_context>

<pallas_src>
import functools

import jax
import jax.numpy as jnp
from jax.experimental import pallas as pl
from jax.experimental.pallas import tpu as pltpu

_LANE = 128
_MAX_W_TILE_BYTES = 16 << 20   # per-buffer weight-slab cap (fits v7x 64 MiB VMEM double-buffered)
_VMEM_LIMIT_BYTES = 48 << 20   # raised scoped VMEM limit (<= physical on v5e/v6e/v7x)


def _round_up(x, m):
    return (x + m - 1) // m * m


def _pad_axis(a, axis, new_size):
    if a.shape[axis] == new_size:
        return a
    pad = [(0, 0)] * a.ndim
    pad[axis] = (0, new_size - a.shape[axis])
    return jnp.pad(a, pad)


def _pick_tk(K, tn, itemsize):
    """Largest reduction-depth tk such that a (tk, tn) weight tile stays under the cap."""
    cap = max(1, _MAX_W_TILE_BYTES // (tn * itemsize))
    if cap >= K:
        return K, K                       # single K step, possibly ragged (full-dim block is legal)
    tk = max(_LANE, (cap // _LANE) * _LANE)
    return tk, _round_up(K, tk)


# --------------------------------------------------------------------------- #
# Generic linear (+ optional ReLU): used for fc1.
# --------------------------------------------------------------------------- #
def _linear_kernel(x_ref, w_ref, b_ref, o_ref, *, relu):
    k = pl.program_id(1)

    @pl.when(k == 0)
    def _():
        o_ref[...] = jnp.zeros_like(o_ref)

    # bf16 x bf16 -> f32, accumulated directly into the resident f32 output block.
    o_ref[...] += jnp.dot(x_ref[...], w_ref[...], preferred_element_type=jnp.float32)

    @pl.when(k == pl.num_programs(1) - 1)
    def _():
        y = o_ref[...] + b_ref[...]
        if relu:
            y = jnp.maximum(y, 0.0)
        o_ref[...] = y


def pallas_linear(x, w, b, *, relu, n_splits=2):
    """y = x @ w + b (optionally ReLU).  x: (B, K), w: (K, N), b: (N,) -> f32 (B, N)."""
    B, K = x.shape
    Kw, N = w.shape
    assert K == Kw

    n_pad = _round_up(N, n_splits * _LANE)
    tn = n_pad // n_splits
    tk, k_pad = _pick_tk(K, tn, jnp.dtype(w.dtype).itemsize)

    xp = _pad_axis(x, 1, k_pad).astype(w.dtype)
    wp = _pad_axis(_pad_axis(w, 0, k_pad), 1, n_pad)
    bp = _pad_axis(b.astype(jnp.float32).reshape(1, N), 1, n_pad)

    grid = (n_splits, k_pad // tk)
    kernel = functools.partial(_linear_kernel, relu=relu)

    out = pl.pallas_call(
        kernel,
        out_shape=jax.ShapeDtypeStruct((B, n_pad), jnp.float32),
        grid_spec=pltpu.PrefetchScalarGridSpec(
            num_scalar_prefetch=0,
            grid=grid,
            in_specs=[
                pl.BlockSpec((B, tk), lambda i, k: (0, k)),     # activations
                pl.BlockSpec((tk, tn), lambda i, k: (k, i)),    # weight row-slab
                pl.BlockSpec((1, tn), lambda i, k: (0, i)),     # bias
            ],
            out_specs=pl.BlockSpec((B, tn), lambda i, k: (0, i)),
        ),
        compiler_params=pltpu.CompilerParams(
            dimension_semantics=("parallel", "arbitrary"),
            vmem_limit_bytes=_VMEM_LIMIT_BYTES,
        ),
    )(xp, wp, bp)
    return out[:, :N] if n_pad != N else out


# --------------------------------------------------------------------------- #
# Fused fc2 (+ReLU, eval-mode dropout) + fc3: one kernel, no HBM round trip for h.
# --------------------------------------------------------------------------- #
def _fused_tail_kernel(h_ref, w2_ref, b2_ref, w3_ref, o_ref, acc_ref):
    k = pl.program_id(1)

    @pl.when(k == 0)
    def _():
        acc_ref[...] = jnp.zeros_like(acc_ref)

    acc_ref[...] += jnp.dot(h_ref[...], w2_ref[...], preferred_element_type=jnp.float32)

    @pl.when(k == pl.num_programs(1) - 1)
    def _():
        h2 = jnp.maximum(acc_ref[...] + b2_ref[...], 0.0)   # fc2 bias + ReLU
        # dropout (eval mode) == identity
        cls = jnp.dot(h2.astype(w3_ref.dtype), w3_ref[...],
                      preferred_element_type=jnp.float32)    # partial fc3 contribution
        o_ref[0] = cls


def pallas_fc2_fc3(h, w2, b2, w3, b3, *, n_splits=2):
    """relu(h @ w2 + b2) @ w3 + b3, fused.  Hidden columns are split n_splits ways
    ("parallel" axis -> v7x megacore); each split writes its partial fc3 output,
    summed (trivially small) outside."""
    B, K = h.shape
    Kw, N2 = w2.shape
    assert K == Kw and w3.shape[0] == N2
    N3 = w3.shape[1]

    n2p = _round_up(N2, n_splits * _LANE)
    tn2 = n2p // n_splits
    n3p = _round_up(N3, _LANE)
    tk, k_pad = _pick_tk(K, tn2, jnp.dtype(w2.dtype).itemsize)

    hp = _pad_axis(h, 1, k_pad).astype(w2.dtype)
    w2p = _pad_axis(_pad_axis(w2, 0, k_pad), 1, n2p)
    b2p = _pad_axis(b2.astype(jnp.float32).reshape(1, N2), 1, n2p)
    w3p = _pad_axis(_pad_axis(w3, 0, n2p), 1, n3p)

    grid = (n_splits, k_pad // tk)

    partial = pl.pallas_call(
        _fused_tail_kernel,
        out_shape=jax.ShapeDtypeStruct((n_splits, B, n3p), jnp.float32),
        grid_spec=pltpu.PrefetchScalarGridSpec(
            num_scalar_prefetch=0,
            grid=grid,
            in_specs=[
                pl.BlockSpec((B, tk), lambda i, k: (0, k)),      # hidden activations
                pl.BlockSpec((tk, tn2), lambda i, k: (k, i)),    # fc2 weight row-slab
                pl.BlockSpec((1, tn2), lambda i, k: (0, i)),     # fc2 bias
                pl.BlockSpec((tn2, n3p), lambda i, k: (i, 0)),   # fc3 weight (K-invariant, resident)
            ],
            out_specs=pl.BlockSpec((1, B, n3p), lambda i, k: (i, 0, 0)),
            scratch_shapes=[pltpu.VMEM((B, tn2), jnp.float32)],
        ),
        compiler_params=pltpu.CompilerParams(
            dimension_semantics=("parallel", "arbitrary"),
            vmem_limit_bytes=_VMEM_LIMIT_BYTES,
        ),
    )(hp, w2p, b2p, w3p)

    cls = partial.sum(axis=0)[:, :N3] + b3.astype(jnp.float32)
    return cls


def c3d_head_forward(x, params):
    """C3DHead.forward (eval mode: dropout == identity)."""
    h = pallas_linear(x, params["w1"], params["b1"], relu=True)        # fc1 + ReLU
    # dropout (eval) -> identity
    cls_score = pallas_fc2_fc3(h.astype(params["w2"].dtype),           # fc2 + ReLU (+dropout id) + fc3
                               params["w2"], params["b2"],
                               params["w3"], params["b3"])
    return cls_score


def init_params(key, in_channels, num_classes, hidden=4096, init_std=0.01,
                weight_dtype=jnp.bfloat16):
    k1, k2, k3 = jax.random.split(key, 3)
    # Weights stored (K, N) = transpose of nn.Linear's (out, in); bf16 for
    # weight-streaming bandwidth; biases zero (std matches C3DHead.init_std).
    params = {
        "w1": (init_std * jax.random.normal(k1, (in_channels, hidden), jnp.float32)).astype(weight_dtype),
        "b1": jnp.zeros((hidden,), jnp.float32),
        "w2": (init_std * jax.random.normal(k2, (hidden, hidden), jnp.float32)).astype(weight_dtype),
        "b2": jnp.zeros((hidden,), jnp.float32),
        "w3": (init_std * jax.random.normal(k3, (hidden, num_classes), jnp.float32)).astype(weight_dtype),
        "b3": jnp.zeros((num_classes,), jnp.float32),
    }
    return params


if __name__ == "__main__":
    batch = 2
    in_channels = 32
    num_classes = 10

    key = jax.random.PRNGKey(0)
    kx, kp = jax.random.split(key)
    x = jax.random.normal(kx, (batch, in_channels), jnp.float32)
    params = init_params(kp, in_channels, num_classes)

    out = c3d_head_forward(x, params)
    out = jax.block_until_ready(out)
    assert out.shape == (batch, num_classes), out.shape

    # Reference in plain JAX (same bf16 weight values upcast to f32; eval-mode dropout == identity).
    w1 = params["w1"].astype(jnp.float32)
    w2 = params["w2"].astype(jnp.float32)
    w3 = params["w3"].astype(jnp.float32)
    h = jnp.maximum(x @ w1 + params["b1"], 0.0)
    h = jnp.maximum(h @ w2 + params["b2"], 0.0)
    ref = h @ w3 + params["b3"]
    assert jnp.allclose(out, ref, rtol=1e-2, atol=1e-2), (
        float(jnp.max(jnp.abs(out - ref)))
    )

    print("KERNEL_OK")
</pallas_src>

<mosaic_0001>
module attributes {stable_mosaic.version = 11 : i64} {
  func.func @_linear_kernel(%arg0: i32, %arg1: i32, %arg2: memref<2x32xbf16, #tpu.memory_space<vmem>>, %arg3: memref<32x2048xbf16, #tpu.memory_space<vmem>>, %arg4: memref<1x2048xf32, #tpu.memory_space<vmem>>, %arg5: memref<2x2048xf32, #tpu.memory_space<vmem>>) attributes {dimension_semantics = [#tpu.dimension_semantics<parallel>, #tpu.dimension_semantics<arbitrary>], iteration_bounds = array<i64: 2, 1>, scalar_prefetch = 0 : i64, scratch_operands = 0 : i64, tpu.core_type = #tpu.core_type<tc>, window_params = [{transform_indices = @transform_0, window_bounds = array<i64: 2, 32>}, {transform_indices = @transform_1, window_bounds = array<i64: 32, 2048>}, {transform_indices = @transform_2, window_bounds = array<i64: 1, 2048>}, {transform_indices = @transform_3, window_bounds = array<i64: 2, 2048>}]} {
    %c0_i32 = arith.constant 0 : i32
    %0 = arith.cmpi eq, %arg1, %c0_i32 : i32
    %1 = arith.extui %0 : i1 to i32
    %c0_i32_0 = arith.constant 0 : i32
    %2 = arith.cmpi ne, %1, %c0_i32_0 : i32
    scf.if %2 {
      %cst_10 = arith.constant 0.000000e+00 : f32
      %12 = vector.broadcast %cst_10 : f32 to vector<2x2048xf32>
      %c0_11 = arith.constant 0 : index
      %c0_12 = arith.constant 0 : index
      %13 = vector.load %arg5[%c0_11, %c0_12] : memref<2x2048xf32, #tpu.memory_space<vmem>>, vector<2x2048xf32>
      tpu.vector_store %arg5[%c0_11, %c0_12], %12 {strides = array<i32>} : memref<2x2048xf32, #tpu.memory_space<vmem>>, vector<2x2048xf32>,
    } else {
    }
    %c0 = arith.constant 0 : index
    %c0_1 = arith.constant 0 : index
    %3 = vector.load %arg5[%c0, %c0_1] : memref<2x2048xf32, #tpu.memory_space<vmem>>, vector<2x2048xf32>
    %c0_2 = arith.constant 0 : index
    %c0_3 = arith.constant 0 : index
    %4 = vector.load %arg2[%c0_2, %c0_3] : memref<2x32xbf16, #tpu.memory_space<vmem>>, vector<2x32xbf16>
    %c0_4 = arith.constant 0 : index
    %c0_5 = arith.constant 0 : index
    %5 = vector.load %arg3[%c0_4, %c0_5] : memref<32x2048xbf16, #tpu.memory_space<vmem>>, vector<32x2048xbf16>
    %cst = arith.constant dense<0.000000e+00> : vector<2x2048xf32>
    %6 = tpu.matmul %4, %5, %cst {dimension_numbers = #tpu.dot_dimension_numbers<[1], [0], [0], [1], [0, 0, 1, 1], [], []>} : vector<2x32xbf16>, vector<32x2048xbf16>, vector<2x2048xf32> -> vector<2x2048xf32>
    %7 = arith.addf %3, %6 : vector<2x2048xf32>
    %c0_6 = arith.constant 0 : index
    %c0_7 = arith.constant 0 : index
    %8 = vector.load %arg5[%c0_6, %c0_7] : memref<2x2048xf32, #tpu.memory_space<vmem>>, vector<2x2048xf32>
    tpu.vector_store %arg5[%c0_6, %c0_7], %7 {strides = array<i32>} : memref<2x2048xf32, #tpu.memory_space<vmem>>, vector<2x2048xf32>,
    %c0_i32_8 = arith.constant 0 : i32
    %9 = arith.cmpi eq, %arg1, %c0_i32_8 : i32
    %10 = arith.extui %9 : i1 to i32
    %c0_i32_9 = arith.constant 0 : i32
    %11 = arith.cmpi ne, %10, %c0_i32_9 : i32
    scf.if %11 {
      %c0_10 = arith.constant 0 : index
      %c0_11 = arith.constant 0 : index
      %12 = vector.load %arg5[%c0_10, %c0_11] : memref<2x2048xf32, #tpu.memory_space<vmem>>, vector<2x2048xf32>
      %c0_12 = arith.constant 0 : index
      %c0_13 = arith.constant 0 : index
      %13 = vector.load %arg4[%c0_12, %c0_13] : memref<1x2048xf32, #tpu.memory_space<vmem>>, vector<1x2048xf32>
      %14 = vector.broadcast %13 : vector<1x2048xf32> to vector<2x2048xf32>
      %15 = arith.addf %12, %14 : vector<2x2048xf32>
      %cst_14 = arith.constant 0.000000e+00 : f32
      %16 = vector.broadcast %cst_14 : f32 to vector<2x2048xf32>
      %17 = arith.maximumf %15, %16 : vector<2x2048xf32>
      %c0_15 = arith.constant 0 : index
      %c0_16 = arith.constant 0 : index
      %18 = vector.load %arg5[%c0_15, %c0_16] : memref<2x2048xf32, #tpu.memory_space<vmem>>, vector<2x2048xf32>
      tpu.vector_store %arg5[%c0_15, %c0_16], %17 {strides = array<i32>} : memref<2x2048xf32, #tpu.memory_space<vmem>>, vector<2x2048xf32>,
    } else {
    }
    return
  }
  func.func @transform_0(%arg0: i32, %arg1: i32) -> (i32, i32) {
    %c0_i32 = arith.constant 0 : i32
    %c0_i32_0 = arith.constant 0 : i32
    return %c0_i32, %arg1 : i32, i32
  }
  func.func @transform_1(%arg0: i32, %arg1: i32) -> (i32, i32) {
    %c0_i32 = arith.constant 0 : i32
    return %arg1, %arg0 : i32, i32
  }
  func.func @transform_2(%arg0: i32, %arg1: i32) -> (i32, i32) {
    %c0_i32 = arith.constant 0 : i32
    %c0_i32_0 = arith.constant 0 : i32
    return %c0_i32, %arg0 : i32, i32
  }
  func.func @transform_3(%arg0: i32, %arg1: i32) -> (i32, i32) {
    %c0_i32 = arith.constant 0 : i32
    %c0_i32_0 = arith.constant 0 : i32
    return %c0_i32, %arg0 : i32, i32
  }
}

</mosaic_0001>

<llo_original>
// kernel: tpu_custom_call.1
$region0: #{tpu_custom_call.1}
  #allocation0 [shape = 'u32[]', space=smem, size = 0x4, offset = 0x4, fixed_abs, tag = 'smem constant byte address 0x4 - core index']
  #allocation1 [shape = 'u32[144,128]{1,0:T(1,128)}', space=vmem, size = 0x12000, scoped, tag = 'internal scratch']
  %s0 = inlined_call_operand.hbm [shape: bf16[2,32], index: 0, kind: input, shape index: {}]
  %s1 = inlined_call_operand.hbm [shape: bf16[32,4096], index: 1, kind: input, shape index: {}]
  %s2 = inlined_call_operand.hbm [shape: f32[1,4096], index: 2, kind: input, shape index: {}]
  %s3 = inlined_call_operand.hbm [shape: f32[2,4096], index: 3, kind: output, shape index: {}]
  %s4 = sld [smem:[#allocation0]]
  $region65: #{tpu_custom_call.1} parent=0
    _
  %s6 = ssub.s32 1, %s4
  %s7 = scalar_select 0, %s6, %s4
  $region1: #{tpu_custom_call.1} parent=0
    #allocation2 [shape = 'u8[512]{0}', space=vmem, size = 0x400, scoped, tag = 'input window, operand 0, single buffered']
    #allocation3 [shape = 's32[2]{0}', space=sflag, size = 0x8, scoped, tag = 'scoped memory for tpu_custom_call.1']
    #allocation4 [shape = 's32[2]{0}', space=sflag, size = 0x8, scoped, tag = 'scoped memory for tpu_custom_call.1']
    #allocation5 [shape = 'u8[262144]{0}', space=vmem, size = 0x40000, scoped, tag = 'input window, operand 1']
    #allocation6 [shape = 's32[2]{0}', space=sflag, size = 0x8, scoped, tag = 'scoped memory for tpu_custom_call.1']
    #allocation7 [shape = 'u8[16384]{0}', space=vmem, size = 0x4000, scoped, tag = 'input window, operand 2']
    #allocation8 [shape = 'u8[32768]{0}', space=vmem, size = 0x8000, scoped, tag = 'output window, operand 0']
    %8 = vsyncpa [#allocation3], 0
    %9 = vsyncpa [#allocation6], 0
    %s10 = scalar_lea.sflag [#allocation6], 1
    %11 = vsyncpa %s10, 0
    %12 = vsyncpa [#allocation4], 0
    %s13 = scalar_lea.sflag [#allocation4], 1
    %14 = vsyncpa %s13, 0
    loop: start=0, step=1, limit=4
    $region2: #{tpu_custom_call.1} parent=1 // loop_pre_header
      _
    $region3: #{tpu_custom_call.1} parent=1 // loop_header
      %s16 = sphi 0, %s20
      %p17 = scmp.ge.s32.totalorder %s16, 4
      %s23 = sphi 0, %s35
      %s24 = sphi 0, %s31
      %s25 = sphi 0, %s23
      %s26 = sphi 0, %s24
      %s27 = sphi 0, %s25
      %s28 = sphi 0, %s26
      %s38 = sphi 0, %s40
      %s41 = sphi 0, %s38
      %s42 = sphi 0, %s41
      %s58 = sphi 0, %s42
      %s66 = sphi 0, %s68
      %s69 = sphi 0, %s66
      %s70 = sphi 0, %s69
      %s86 = sphi 0, %s70
      %s92 = sphi 0, %s94
      %s95 = sphi 0, %s92
      %s96 = sphi 0, %s95
      %s112 = sphi 0, %s96
      %s118 = sphi 0, %s120
      %s121 = sphi 0, %s118
      %s122 = sphi 0, %s121
      %s138 = sphi 0, %s122
    $region4: #{tpu_custom_call.1} parent=1 // loop_header_branch
      %19 = sbr.rel (%p17) target = $region8
    $region5: #{tpu_custom_call.1} parent=1 // loop_body
      %s21 = ssub.s32 %s16, 1
      %s22 = ssub.s32 %s16, 2
      %s29 = sadd.s32 1, %s24
      %p30 = scmp.ge.s32.totalorder %s29, 1
      %s31 = scalar_select %p30, 0, %s29
      %s32 = sadd.s32 1, %s23
      %s33 = scalar_select %p30, %s32, %s23
      %p34 = scmp.ge.s32.totalorder %s33, 2
      %s35 = scalar_select %p34, 0, %s33
      %s36 = ssub.s32 %s24, %s31
      %p37 = scmp.eq.s32.totalorder %s36, 0
      %s39 = sadd.s32 %s38, 1
      %s40 = scalar_select %p37, %s38, %s39
      %p43 = pneg %p37
      %p44 = scmp.eq.s32.totalorder %s16, 1
      %p45 = por %p43, %p44
      %p46 = scmp.ne.s32.totalorder %s38, %s41
      %p47 = scmp.eq.s32.totalorder %s16, 0
      %p48 = por %p46, %p47
      %p49 = scmp.ne.s32.totalorder %s38, %s41
      %p50 = scmp.eq.s32.totalorder %s21, 1
      %p51 = por %p49, %p50
      %p52 = scmp.ne.s32.totalorder %s41, %s42
      %p53 = scmp.eq.s32.totalorder %s21, 0
      %p54 = por %p52, %p53
      %p55 = scmp.ne.s32.totalorder %s41, %s42
      %p56 = scmp.eq.s32.totalorder %s22, 1
      %p57 = por %p55, %p56
      %p59 = scmp.ne.s32.totalorder %s42, %s58
      %p60 = scmp.eq.s32.totalorder %s22, 0
      %p61 = por %p59, %p60
      %s62 = ssub.s32 %s24, %s31
      %s63 = ssub.s32 %s23, %s35
      %s64 = sor.u32 %s62, %s63
      %p65 = scmp.eq.s32.totalorder %s64, 0
      %s67 = sadd.s32 %s66, 1
      %s68 = scalar_select %p65, %s66, %s67
      %p71 = pneg %p65
      %p72 = scmp.eq.s32.totalorder %s16, 1
      %p73 = por %p71, %p72
      %p74 = scmp.ne.s32.totalorder %s66, %s69
      %p75 = scmp.eq.s32.totalorder %s16, 0
      %p76 = por %p74, %p75
      %p77 = scmp.ne.s32.totalorder %s66, %s69
      %p78 = scmp.eq.s32.totalorder %s21, 1
      %p79 = por %p77, %p78
      %p80 = scmp.ne.s32.totalorder %s69, %s70
      %p81 = scmp.eq.s32.totalorder %s21, 0
      %p82 = por %p80, %p81
      %p83 = scmp.ne.s32.totalorder %s69, %s70
      %p84 = scmp.eq.s32.totalorder %s22, 1
      %p85 = por %p83, %p84
      %p87 = scmp.ne.s32.totalorder %s70, %s86
      %p88 = scmp.eq.s32.totalorder %s22, 0
      %p89 = por %p87, %p88
      %s90 = ssub.s32 %s23, %s35
      %p91 = scmp.eq.s32.totalorder %s90, 0
      %s93 = sadd.s32 %s92, 1
      %s94 = scalar_select %p91, %s92, %s93
      %p97 = pneg %p91
      %p98 = scmp.eq.s32.totalorder %s16, 1
      %p99 = por %p97, %p98
      %p100 = scmp.ne.s32.totalorder %s92, %s95
      %p101 = scmp.eq.s32.totalorder %s16, 0
      %p102 = por %p100, %p101
      %p103 = scmp.ne.s32.totalorder %s92, %s95
      %p104 = scmp.eq.s32.totalorder %s21, 1
      %p105 = por %p103, %p104
      %p106 = scmp.ne.s32.totalorder %s95, %s96
      %p107 = scmp.eq.s32.totalorder %s21, 0
      %p108 = por %p106, %p107
      %p109 = scmp.ne.s32.totalorder %s95, %s96
      %p110 = scmp.eq.s32.totalorder %s22, 1
      %p111 = por %p109, %p110
      %p113 = scmp.ne.s32.totalorder %s96, %s112
      %p114 = scmp.eq.s32.totalorder %s22, 0
      %p115 = por %p113, %p114
      %s116 = ssub.s32 %s23, %s35
      %p117 = scmp.eq.s32.totalorder %s116, 0
      %s119 = sadd.s32 %s118, 1
      %s120 = scalar_select %p117, %s118, %s119
      %p123 = pneg %p117
      %p124 = scmp.eq.s32.totalorder %s16, 1
      %p125 = por %p123, %p124
      %p126 = scmp.ne.s32.totalorder %s118, %s121
      %p127 = scmp.eq.s32.totalorder %s16, 0
      %p128 = por %p126, %p127
      %p129 = scmp.ne.s32.totalorder %s118, %s121
      %p130 = scmp.eq.s32.totalorder %s21, 1
      %p131 = por %p129, %p130
      %p132 = scmp.ne.s32.totalorder %s121, %s122
      %p133 = scmp.eq.s32.totalorder %s21, 0
      %p134 = por %p132, %p133
      %p135 = scmp.ne.s32.totalorder %s121, %s122
      %p136 = scmp.eq.s32.totalorder %s22, 1
      %p137 = por %p135, %p136
      %p139 = scmp.ne.s32.totalorder %s122, %s138
      %p140 = scmp.eq.s32.totalorder %s22, 0
      %p141 = por %p139, %p140
      %p142 = scmp.le.s32.totalorder 1, %s16
      %p143 = scmp.lt.s32.totalorder %s16, 3
      %p144 = pnand %p142, %p143
      %p145 = pneg %p144
      // Predicated region
      $region9: #{tpu_custom_call.1} parent=5 // pred_check
        _
      $region10: #{tpu_custom_call.1} parent=5 // pred_check_branch
        %147 = sbr.rel (%p144) target = $region12
      $region11: #{tpu_custom_call.1} parent=5 // pred_region
        %s148 = ssub.s32 %s16, 1
        // Predicated region
        $region13: #{tpu_custom_call.1} parent=11 // pred_check
          %p149 = pneg %p54
        $region14: #{tpu_custom_call.1} parent=11 // pred_check_branch
          %151 = sbr.rel (%p149) target = $region16
        $region15: #{tpu_custom_call.1} parent=11 // pred_region
          %s153 = ssub.s32 16, 16
          %154 = vsyncadd [#allocation3], %s153
          %s155 = smul.addr %s26, 16
          %s156 = scalar_lea.hbm %s0, %s155
          %s158 = sshll.u32 [#allocation2], 4
          %s159 = int_to_ptr.vmem [resolvable:$true] %s158
          %161 = dma.hbm_to_vmem [thread:$0]  %s156, 16, %s159, [#allocation3]
        $region16: #{tpu_custom_call.1} parent=11 // pred_fallthru
          _
      $region12: #{tpu_custom_call.1} parent=5 // pred_fallthru
        _
      %p162 = scmp.lt.s32.totalorder %s16, 2
      // Predicated region
      $region17: #{tpu_custom_call.1} parent=5 // pred_check
        %p163 = pneg %p162
      $region18: #{tpu_custom_call.1} parent=5 // pred_check_branch
        %165 = sbr.rel (%p163) target = $region20
      $region19: #{tpu_custom_call.1} parent=5 // pred_region
        // Predicated region
        $region21: #{tpu_custom_call.1} parent=19 // pred_check
          %p166 = pneg %p76
        $region22: #{tpu_custom_call.1} parent=19 // pred_check_branch
          %168 = sbr.rel (%p166) target = $region24
        $region23: #{tpu_custom_call.1} parent=19 // pred_region
          %s169 = sand.u32 %s16, 1
          %s170 = scalar_lea.sflag [#allocation6], %s169
          %s171 = sand.u32 %s66, 1
          %s172 = smul.addr %s171, 256
          %s173 = scalar_lea.vmem [#allocation5], %s172
          %s174 = smul.u32 4, %s24
          %s175 = smul.u32 16, %s23
          %s177 = ssub.s32 4096, 4096
          %178 = vsyncadd %s170, %s177
          %s179 = smul.addr %s174, 32
          %s180 = sadd.s32 %s175, %s179
          %s181 = smul.addr %s180, 64
          %s182 = scalar_lea.hbm %s1, %s181
          %s183 = sshll.u32 %s173, 4
          %s184 = int_to_ptr.vmem [resolvable:$true] %s183
          %189 = dma.hbm_to_vmem [thread:$0]  %s182, 4096, %s184, %s170, 2048, 1024, 64
        $region24: #{tpu_custom_call.1} parent=19 // pred_fallthru
          _
        // Predicated region
        $region25: #{tpu_custom_call.1} parent=19 // pred_check
          %p190 = pneg %p102
        $region26: #{tpu_custom_call.1} parent=19 // pred_check_branch
          %192 = sbr.rel (%p190) target = $region28
        $region27: #{tpu_custom_call.1} parent=19 // pred_region
          %s193 = sand.u32 %s16, 1
          %s194 = scalar_lea.sflag [#allocation6], %s193
          %s195 = sand.u32 %s92, 1
          %s196 = smul.addr %s195, 16
          %s197 = scalar_lea.vmem [#allocation7], %s196
          %s198 = smul.u32 16, %s23
          %s200 = ssub.s32 256, 256
          %201 = vsyncadd %s194, %s200
          %s202 = smul.addr %s198, 16
          %s203 = scalar_lea.hbm %s2, %s202
          %s205 = sshll.u32 %s197, 4
          %s206 = int_to_ptr.vmem [resolvable:$true] %s205
          %208 = dma.hbm_to_vmem [thread:$0]  %s203, 256, %s206, %s194
        $region28: #{tpu_custom_call.1} parent=19 // pred_fallthru
          _
      $region20: #{tpu_custom_call.1} parent=5 // pred_fallthru
        _
      %p209 = scmp.le.s32.totalorder 1, %s16
      %p210 = scmp.lt.s32.totalorder %s16, 3
      %p211 = pnand %p209, %p210
      %p212 = pneg %p211
      // Predicated region
      $region29: #{tpu_custom_call.1} parent=5 // pred_check
        _
      $region30: #{tpu_custom_call.1} parent=5 // pred_check_branch
        %214 = sbr.rel (%p211) target = $region32
      $region31: #{tpu_custom_call.1} parent=5 // pred_region
        %s215 = ssub.s32 %s16, 1
        // Predicated region
        $region33: #{tpu_custom_call.1} parent=31 // pred_check
          %p216 = pneg %p54
        $region34: #{tpu_custom_call.1} parent=31 // pred_check_branch
          %218 = sbr.rel (%p216) target = $region36
        $region35: #{tpu_custom_call.1} parent=31 // pred_region
          %219 = dma.done [#allocation3], 16
        $region36: #{tpu_custom_call.1} parent=31 // pred_fallthru
          _
        %s220 = sand.u32 %s21, 1
        %s221 = scalar_lea.sflag [#allocation6], %s220
        %s222 = sand.u32 %s69, 1
        %s223 = smul.addr %s222, 256
        %s224 = scalar_lea.vmem [#allocation5], %s223
        // Predicated region
        $region37: #{tpu_custom_call.1} parent=31 // pred_check
          %p225 = pneg %p82
        $region38: #{tpu_custom_call.1} parent=31 // pred_check_branch
          %227 = sbr.rel (%p225) target = $region40
        $region39: #{tpu_custom_call.1} parent=31 // pred_region
          %228 = dma.done %s221, 4096
        $region40: #{tpu_custom_call.1} parent=31 // pred_fallthru
          _
        %s229 = sand.u32 %s21, 1
        %s230 = scalar_lea.sflag [#allocation6], %s229
        %s231 = sand.u32 %s95, 1
        %s232 = smul.addr %s231, 16
        %s233 = scalar_lea.vmem [#allocation7], %s232
        // Predicated region
        $region41: #{tpu_custom_call.1} parent=31 // pred_check
          %p234 = pneg %p108
        $region42: #{tpu_custom_call.1} parent=31 // pred_check_branch
          %236 = sbr.rel (%p234) target = $region44
        $region43: #{tpu_custom_call.1} parent=31 // pred_region
          %237 = dma.done %s230, 256
        $region44: #{tpu_custom_call.1} parent=31 // pred_fallthru
          _
        %p238 = pneg %p54
        %p239 = pneg %p51
        %s240 = sand.u32 %s21, 1
        %s241 = scalar_lea.sflag [#allocation6], %s240
        %s242 = sand.u32 %s69, 1
        %s243 = smul.addr %s242, 256
        %s244 = scalar_lea.vmem [#allocation5], %s243
        %p245 = pneg %p82
        %p246 = pneg %p79
        %s247 = sand.u32 %s21, 1
        %s248 = scalar_lea.sflag [#allocation6], %s247
        %s249 = sand.u32 %s95, 1
        %s250 = smul.addr %s249, 16
        %s251 = scalar_lea.vmem [#allocation7], %s250
        %p252 = pneg %p108
        %p253 = pneg %p105
        %p254 = pneg %p134
        %p255 = pneg %p131
        %s256 = sand.u32 %s121, 1
        %s257 = scalar_lea.sflag [#allocation4], %s256
        %s258 = sand.u32 %s121, 1
        %s259 = smul.addr %s258, 32
        %s260 = scalar_lea.vmem [#allocation8], %s259
        %s261 = smul.u32 4, %s26
        %s262 = smul.u32 16, %s25
        %s263 = smul.u32 16, %s25
        %s264 = smul.u32 16, %s25
        %p266 = scmp.eq.s32.totalorder %s26, 0
        // Predicated region
        $region45: #{tpu_custom_call.1} parent=31 // pred_check
          %p267 = pneg %p266
        $region46: #{tpu_custom_call.1} parent=31 // pred_check_branch
          %269 = sbr.rel (%p267) target = $region48
        $region47: #{tpu_custom_call.1} parent=31 // pred_region
          %270 = vst [vmem:[%s260] sm:$0xff] 0.0
          %271 = vst [vmem:[%s260 + $0x8] sm:$0xff] 0.0
          %272 = vst [vmem:[%s260 + $0x10] sm:$0xff] 0.0
          %273 = vst [vmem:[%s260 + $0x18] sm:$0xff] 0.0
        $region48: #{tpu_custom_call.1} parent=31 // pred_fallthru
          _
        %v274 = vld [vmem:[%s260] sm:$0xff]
        %v275 = vld [vmem:[%s260 + $0x8] sm:$0xff]
        %v276 = vld [vmem:[%s260 + $0x10] sm:$0xff]
        %v277 = vld [vmem:[%s260 + $0x18] sm:$0xff]
        %v278 = vld [vmem:[#allocation2] sm:$0x1]
        %v279 = vld [vmem:[%s224] sm:$0xff]
        %v280 = vld [vmem:[%s224 + $0x8] sm:$0xff]
        %v281 = vld [vmem:[%s224 + $0x10] sm:$0xff]
        %v282 = vld [vmem:[%s224 + $0x18] sm:$0xff]
        %v283 = vld [vmem:[%s224 + $0x20] sm:$0xff]
        %v284 = vld [vmem:[%s224 + $0x28] sm:$0xff]
        %v285 = vld [vmem:[%s224 + $0x30] sm:$0xff]
        %v286 = vld [vmem:[%s224 + $0x38] sm:$0xff]
        %v287 = vld [vmem:[%s224 + $0x40] sm:$0xff]
        %v288 = vld [vmem:[%s224 + $0x48] sm:$0xff]
        %v289 = vld [vmem:[%s224 + $0x50] sm:$0xff]
        %v290 = vld [vmem:[%s224 + $0x58] sm:$0xff]
        %v291 = vld [vmem:[%s224 + $0x60] sm:$0xff]
        %v292 = vld [vmem:[%s224 + $0x68] sm:$0xff]
        %v293 = vld [vmem:[%s224 + $0x70] sm:$0xff]
        %v294 = vld [vmem:[%s224 + $0x78] sm:$0xff]
        %v295 = vld [vmem:[%s224 + $0x80] sm:$0xff]
        %v296 = vld [vmem:[%s224 + $0x88] sm:$0xff]
        %v297 = vld [vmem:[%s224 + $0x90] sm:$0xff]
        %v298 = vld [vmem:[%s224 + $0x98] sm:$0xff]
        %v299 = vld [vmem:[%s224 + $0xa0] sm:$0xff]
        %v300 = vld [vmem:[%s224 + $0xa8] sm:$0xff]
        %v301 = vld [vmem:[%s224 + $0xb0] sm:$0xff]
        %v302 = vld [vmem:[%s224 + $0xb8] sm:$0xff]
        %v303 = vld [vmem:[%s224 + $0xc0] sm:$0xff]
        %v304 = vld [vmem:[%s224 + $0xc8] sm:$0xff]
        %v305 = vld [vmem:[%s224 + $0xd0] sm:$0xff]
        %v306 = vld [vmem:[%s224 + $0xd8] sm:$0xff]
        %v307 = vld [vmem:[%s224 + $0xe0] sm:$0xff]
        %v308 = vld [vmem:[%s224 + $0xe8] sm:$0xff]
        %v309 = vld [vmem:[%s224 + $0xf0] sm:$0xff]
        %v310 = vld [vmem:[%s224 + $0xf8] sm:$0xff]
        %v343 = vunpack.c.l.b16 %v279
        %v344 = vunpack.c.h.b16 %v279
        %v345 = vunpack.c.l.b16 %v280
        %v346 = vunpack.c.h.b16 %v280
        %v347 = vunpack.c.l.b16 %v281
        %v348 = vunpack.c.h.b16 %v281
        %v349 = vunpack.c.l.b16 %v282
        %v350 = vunpack.c.h.b16 %v282
        %v351 = vunpack.c.l.b16 %v283
        %v352 = vunpack.c.h.b16 %v283
        %v353 = vunpack.c.l.b16 %v284
        %v354 = vunpack.c.h.b16 %v284
        %v355 = vunpack.c.l.b16 %v285
        %v356 = vunpack.c.h.b16 %v285
        %v357 = vunpack.c.l.b16 %v286
        %v358 = vunpack.c.h.b16 %v286
        %v359 = vunpack.c.l.b16 %v287
        %v360 = vunpack.c.h.b16 %v287
        %v361 = vunpack.c.l.b16 %v288
        %v362 = vunpack.c.h.b16 %v288
        %v363 = vunpack.c.l.b16 %v289
        %v364 = vunpack.c.h.b16 %v289
        %v365 = vunpack.c.l.b16 %v290
        %v366 = vunpack.c.h.b16 %v290
        %v367 = vunpack.c.l.b16 %v291
        %v368 = vunpack.c.h.b16 %v291
        %v369 = vunpack.c.l.b16 %v292
        %v370 = vunpack.c.h.b16 %v292
        %v371 = vunpack.c.l.b16 %v293
        %v372 = vunpack.c.h.b16 %v293
        %v373 = vunpack.c.l.b16 %v294
        %v374 = vunpack.c.h.b16 %v294
        %v375 = vunpack.c.l.b16 %v295
        %v376 = vunpack.c.h.b16 %v295
        %v377 = vunpack.c.l.b16 %v296
        %v378 = vunpack.c.h.b16 %v296
        %v379 = vunpack.c.l.b16 %v297
        %v380 = vunpack.c.h.b16 %v297
        %v381 = vunpack.c.l.b16 %v298
        %v382 = vunpack.c.h.b16 %v298
        %v383 = vunpack.c.l.b16 %v299
        %v384 = vunpack.c.h.b16 %v299
        %v385 = vunpack.c.l.b16 %v300
        %v386 = vunpack.c.h.b16 %v300
        %v387 = vunpack.c.l.b16 %v301
        %v388 = vunpack.c.h.b16 %v301
        %v389 = vunpack.c.l.b16 %v302
        %v390 = vunpack.c.h.b16 %v302
        %v391 = vunpack.c.l.b16 %v303
        %v392 = vunpack.c.h.b16 %v303
        %v393 = vunpack.c.l.b16 %v304
        %v394 = vunpack.c.h.b16 %v304
        %v395 = vunpack.c.l.b16 %v305
        %v396 = vunpack.c.h.b16 %v305
        %v397 = vunpack.c.l.b16 %v306
        %v398 = vunpack.c.h.b16 %v306
        %v399 = vunpack.c.l.b16 %v307
        %v400 = vunpack.c.h.b16 %v307
        %v401 = vunpack.c.l.b16 %v308
        %v402 = vunpack.c.h.b16 %v308
        %v403 = vunpack.c.l.b16 %v309
        %v404 = vunpack.c.h.b16 %v309
        %v405 = vunpack.c.l.b16 %v310
        %v406 = vunpack.c.h.b16 %v310
        %v407 = vpack.c.b16 %v359, %v343
        %v408 = vpack.c.b16 %v360, %v344
        %v409 = vpack.c.b16 %v361, %v345
        %v410 = vpack.c.b16 %v362, %v346
        %v411 = vpack.c.b16 %v363, %v347
        %v412 = vpack.c.b16 %v364, %v348
        %v413 = vpack.c.b16 %v365, %v349
        %v414 = vpack.c.b16 %v366, %v350
        %v415 = vpack.c.b16 %v367, %v351
        %v416 = vpack.c.b16 %v368, %v352
        %v417 = vpack.c.b16 %v369, %v353
        %v418 = vpack.c.b16 %v370, %v354
        %v419 = vpack.c.b16 %v371, %v355
        %v420 = vpack.c.b16 %v372, %v356
        %v421 = vpack.c.b16 %v373, %v357
        %v422 = vpack.c.b16 %v374, %v358
        %v423 = vpack.c.b16 %v391, %v375
        %v424 = vpack.c.b16 %v392, %v376
        %v425 = vpack.c.b16 %v393, %v377
        %v426 = vpack.c.b16 %v394, %v378
        %v427 = vpack.c.b16 %v395, %v379
        %v428 = vpack.c.b16 %v396, %v380
        %v429 = vpack.c.b16 %v397, %v381
        %v430 = vpack.c.b16 %v398, %v382
        %v431 = vpack.c.b16 %v399, %v383
        %v432 = vpack.c.b16 %v400, %v384
        %v433 = vpack.c.b16 %v401, %v385
        %v434 = vpack.c.b16 %v402, %v386
        %v435 = vpack.c.b16 %v403, %v387
        %v436 = vpack.c.b16 %v404, %v388
        %v437 = vpack.c.b16 %v405, %v389
        %v438 = vpack.c.b16 %v406, %v390
        %vm471 = vcmask 261120
        %v473 = vsel %vm471, %v278, 0
        %475 = vmatprep.subr.bf16.mxu0 %v408
        %476 = vmatpush1.bf16.msra.mxu0 %v407
        %477 = vmatprep.subr.bf16.mxu0 %v424
        %478 = vmatpush1.bf16.msra.mxu0 %v423
        %479 = vmatprep.subr.bf16.mxu0 0
        %480 = vmatpush1.bf16.msra.mxu0 0
        %481 = vmatprep.subr.bf16.mxu0 0
        %482 = vmatpush1.bf16.msra.mxu0 0
        %483 = vmatprep.subr.bf16.mxu0 0
        %484 = vmatpush1.bf16.msra.mxu0 0
        %485 = vmatprep.subr.bf16.mxu0 0
        %486 = vmatpush1.bf16.msra.mxu0 0
        %487 = vmatprep.subr.bf16.mxu0 0
        %488 = vmatpush1.bf16.msra.mxu0 0
        %489 = vmatprep.subr.bf16.mxu0 0
        %490 = vmatpush1.bf16.msra.mxu0 0
        %491 = vmatprep.subr.bf16.mxu0 0
        %492 = vmatpush1.bf16.msra.mxu0 0
        %493 = vmatprep.subr.bf16.mxu0 0
        %494 = vmatpush1.bf16.msra.mxu0 0
        %495 = vmatprep.subr.bf16.mxu0 0
        %496 = vmatpush1.bf16.msra.mxu0 0
        %497 = vmatprep.subr.bf16.mxu0 0
        %498 = vmatpush1.bf16.msra.mxu0 0
        %499 = vmatprep.subr.bf16.mxu0 0
        %500 = vmatpush1.bf16.msra.mxu0 0
        %501 = vmatprep.subr.bf16.mxu0 0
        %502 = vmatpush1.bf16.msra.mxu0 0
        %503 = vmatprep.subr.bf16.mxu0 0
        %504 = vmatpush1.bf16.msra.mxu0 0
        %505 = vmatprep.subr.bf16.mxu0 0
        %506 = vmatpush1.bf16.msra.mxu0 0
        %507 = vmatprep.mubr.bf16.mxu0 0
        %508 = vmatmul.mubr.bf16.gmra.mrb[0].mxu0 %v473
        %v509 = vpop.f32.mrb[0].mxu0
        %v510 = vadd.f32 0.0, %v509
        %v511 = vpop.f32.mrb[0].mxu0
        %v512 = vadd.f32 0.0, %v511
        %v513 = vpop.f32.mrb[0].mxu0
        %v514 = vpop.f32.mrb[0].mxu0
        %515 = vdwg.mxu0
        %516 = vmatprep.subr.bf16.mxu0 %v410
        %517 = vmatpush1.bf16.msra.mxu0 %v409
        %518 = vmatprep.subr.bf16.mxu0 %v426
        %519 = vmatpush1.bf16.msra.mxu0 %v425
        %520 = vmatprep.subr.bf16.mxu0 0
        %521 = vmatpush1.bf16.msra.mxu0 0
        %522 = vmatprep.subr.bf16.mxu0 0
        %523 = vmatpush1.bf16.msra.mxu0 0
        %524 = vmatprep.subr.bf16.mxu0 0
        %525 = vmatpush1.bf16.msra.mxu0 0
        %526 = vmatprep.subr.bf16.mxu0 0
        %527 = vmatpush1.bf16.msra.mxu0 0
        %528 = vmatprep.subr.bf16.mxu0 0
        %529 = vmatpush1.bf16.msra.mxu0 0
        %530 = vmatprep.subr.bf16.mxu0 0
        %531 = vmatpush1.bf16.msra.mxu0 0
        %532 = vmatprep.subr.bf16.mxu0 0
        %533 = vmatpush1.bf16.msra.mxu0 0
        %534 = vmatprep.subr.bf16.mxu0 0
        %535 = vmatpush1.bf16.msra.mxu0 0
        %536 = vmatprep.subr.bf16.mxu0 0
        %537 = vmatpush1.bf16.msra.mxu0 0
        %538 = vmatprep.subr.bf16.mxu0 0
        %539 = vmatpush1.bf16.msra.mxu0 0
        %540 = vmatprep.subr.bf16.mxu0 0
        %541 = vmatpush1.bf16.msra.mxu0 0
        %542 = vmatprep.subr.bf16.mxu0 0
        %543 = vmatpush1.bf16.msra.mxu0 0
        %544 = vmatprep.subr.bf16.mxu0 0
        %545 = vmatpush1.bf16.msra.mxu0 0
        %546 = vmatprep.subr.bf16.mxu0 0
        %547 = vmatpush1.bf16.msra.mxu0 0
        %548 = vmatprep.mubr.bf16.mxu0 0
        %549 = vmatmul.mubr.bf16.gmra.mrb[0].mxu0 %v473
        %v550 = vpop.f32.mrb[0].mxu0
        %v551 = vadd.f32 0.0, %v550
        %v552 = vpop.f32.mrb[0].mxu0
        %v553 = vadd.f32 0.0, %v552
        %v554 = vpop.f32.mrb[0].mxu0
        %v555 = vpop.f32.mrb[0].mxu0
        %556 = vdwg.mxu0
        %557 = vmatprep.subr.bf16.mxu0 %v412
        %558 = vmatpush1.bf16.msra.mxu0 %v411
        %559 = vmatprep.subr.bf16.mxu0 %v428
        %560 = vmatpush1.bf16.msra.mxu0 %v427
        %561 = vmatprep.subr.bf16.mxu0 0
        %562 = vmatpush1.bf16.msra.mxu0 0
        %563 = vmatprep.subr.bf16.mxu0 0
        %564 = vmatpush1.bf16.msra.mxu0 0
        %565 = vmatprep.subr.bf16.mxu0 0
        %566 = vmatpush1.bf16.msra.mxu0 0
        %567 = vmatprep.subr.bf16.mxu0 0
        %568 = vmatpush1.bf16.msra.mxu0 0
        %569 = vmatprep.subr.bf16.mxu0 0
        %570 = vmatpush1.bf16.msra.mxu0 0
        %571 = vmatprep.subr.bf16.mxu0 0
        %572 = vmatpush1.bf16.msra.mxu0 0
        %573 = vmatprep.subr.bf16.mxu0 0
        %574 = vmatpush1.bf16.msra.mxu0 0
        %575 = vmatprep.subr.bf16.mxu0 0
        %576 = vmatpush1.bf16.msra.mxu0 0
        %577 = vmatprep.subr.bf16.mxu0 0
        %578 = vmatpush1.bf16.msra.mxu0 0
        %579 = vmatprep.subr.bf16.mxu0 0
        %580 = vmatpush1.bf16.msra.mxu0 0
        %581 = vmatprep.subr.bf16.mxu0 0
        %582 = vmatpush1.bf16.msra.mxu0 0
        %583 = vmatprep.subr.bf16.mxu0 0
        %584 = vmatpush1.bf16.msra.mxu0 0
        %585 = vmatprep.subr.bf16.mxu0 0
        %586 = vmatpush1.bf16.msra.mxu0 0
        %587 = vmatprep.subr.bf16.mxu0 0
        %588 = vmatpush1.bf16.msra.mxu0 0
        %589 = vmatprep.mubr.bf16.mxu0 0
        %590 = vmatmul.mubr.bf16.gmra.mrb[0].mxu0 %v473
        %v591 = vpop.f32.mrb[0].mxu0
        %v592 = vadd.f32 0.0, %v591
        %v593 = vpop.f32.mrb[0].mxu0
        %v594 = vadd.f32 0.0, %v593
        %v595 = vpop.f32.mrb[0].mxu0
        %v596 = vpop.f32.mrb[0].mxu0
        %597 = vdwg.mxu0
        %598 = vmatprep.subr.bf16.mxu0 %v414
        %599 = vmatpush1.bf16.msra.mxu0 %v413
        %600 = vmatprep.subr.bf16.mxu0 %v430
        %601 = vmatpush1.bf16.msra.mxu0 %v429
        %602 = vmatprep.subr.bf16.mxu0 0
        %603 = vmatpush1.bf16.msra.mxu0 0
        %604 = vmatprep.subr.bf16.mxu0 0
        %605 = vmatpush1.bf16.msra.mxu0 0
        %606 = vmatprep.subr.bf16.mxu0 0
        %607 = vmatpush1.bf16.msra.mxu0 0
        %608 = vmatprep.subr.bf16.mxu0 0
        %609 = vmatpush1.bf16.msra.mxu0 0
        %610 = vmatprep.subr.bf16.mxu0 0
        %611 = vmatpush1.bf16.msra.mxu0 0
        %612 = vmatprep.subr.bf16.mxu0 0
        %613 = vmatpush1.bf16.msra.mxu0 0
        %614 = vmatprep.subr.bf16.mxu0 0
        %615 = vmatpush1.bf16.msra.mxu0 0
        %616 = vmatprep.subr.bf16.mxu0 0
        %617 = vmatpush1.bf16.msra.mxu0 0
        %618 = vmatprep.subr.bf16.mxu0 0
        %619 = vmatpush1.bf16.msra.mxu0 0
        %620 = vmatprep.subr.bf16.mxu0 0
        %621 = vmatpush1.bf16.msra.mxu0 0
        %622 = vmatprep.subr.bf16.mxu0 0
        %623 = vmatpush1.bf16.msra.mxu0 0
        %624 = vmatprep.subr.bf16.mxu0 0
        %625 = vmatpush1.bf16.msra.mxu0 0
        %626 = vmatprep.subr.bf16.mxu0 0
        %627 = vmatpush1.bf16.msra.mxu0 0
        %628 = vmatprep.subr.bf16.mxu0 0
        %629 = vmatpush1.bf16.msra.mxu0 0
        %630 = vmatprep.mubr.bf16.mxu0 0
        %631 = vmatmul.mubr.bf16.gmra.mrb[0].mxu0 %v473
        %v632 = vpop.f32.mrb[0].mxu0
        %v633 = vadd.f32 0.0, %v632
        %v634 = vpop.f32.mrb[0].mxu0
        %v635 = vadd.f32 0.0, %v634
        %v636 = vpop.f32.mrb[0].mxu0
        %v637 = vpop.f32.mrb[0].mxu0
        %638 = vdwg.mxu0
        %639 = vmatprep.subr.bf16.mxu0 %v416
        %640 = vmatpush1.bf16.msra.mxu0 %v415
        %641 = vmatprep.subr.bf16.mxu0 %v432
        %642 = vmatpush1.bf16.msra.mxu0 %v431
        %643 = vmatprep.subr.bf16.mxu0 0
        %644 = vmatpush1.bf16.msra.mxu0 0
        %645 = vmatprep.subr.bf16.mxu0 0
        %646 = vmatpush1.bf16.msra.mxu0 0
        %647 = vmatprep.subr.bf16.mxu0 0
        %648 = vmatpush1.bf16.msra.mxu0 0
        %649 = vmatprep.subr.bf16.mxu0 0
        %650 = vmatpush1.bf16.msra.mxu0 0
        %651 = vmatprep.subr.bf16.mxu0 0
        %652 = vmatpush1.bf16.msra.mxu0 0
        %653 = vmatprep.subr.bf16.mxu0 0
        %654 = vmatpush1.bf16.msra.mxu0 0
        %655 = vmatprep.subr.bf16.mxu0 0
        %656 = vmatpush1.bf16.msra.mxu0 0
        %657 = vmatprep.subr.bf16.mxu0 0
        %658 = vmatpush1.bf16.msra.mxu0 0
        %659 = vmatprep.subr.bf16.mxu0 0
        %660 = vmatpush1.bf16.msra.mxu0 0
        %661 = vmatprep.subr.bf16.mxu0 0
        %662 = vmatpush1.bf16.msra.mxu0 0
        %663 = vmatprep.subr.bf16.mxu0 0
        %664 = vmatpush1.bf16.msra.mxu0 0
        %665 = vmatprep.subr.bf16.mxu0 0
        %666 = vmatpush1.bf16.msra.mxu0 0
        %667 = vmatprep.subr.bf16.mxu0 0
        %668 = vmatpush1.bf16.msra.mxu0 0
        %669 = vmatprep.subr.bf16.mxu0 0
        %670 = vmatpush1.bf16.msra.mxu0 0
        %671 = vmatprep.mubr.bf16.mxu0 0
        %672 = vmatmul.mubr.bf16.gmra.mrb[0].mxu0 %v473
        %v673 = vpop.f32.mrb[0].mxu0
        %v674 = vadd.f32 0.0, %v673
        %v675 = vpop.f32.mrb[0].mxu0
        %v676 = vadd.f32 0.0, %v675
        %v677 = vpop.f32.mrb[0].mxu0
        %v678 = vpop.f32.mrb[0].mxu0
        %679 = vdwg.mxu0
        %680 = vmatprep.subr.bf16.mxu0 %v418
        %681 = vmatpush1.bf16.msra.mxu0 %v417
        %682 = vmatprep.subr.bf16.mxu0 %v434
        %683 = vmatpush1.bf16.msra.mxu0 %v433
        %684 = vmatprep.subr.bf16.mxu0 0
        %685 = vmatpush1.bf16.msra.mxu0 0
        %686 = vmatprep.subr.bf16.mxu0 0
        %687 = vmatpush1.bf16.msra.mxu0 0
        %688 = vmatprep.subr.bf16.mxu0 0
        %689 = vmatpush1.bf16.msra.mxu0 0
        %690 = vmatprep.subr.bf16.mxu0 0
        %691 = vmatpush1.bf16.msra.mxu0 0
        %692 = vmatprep.subr.bf16.mxu0 0
        %693 = vmatpush1.bf16.msra.mxu0 0
        %694 = vmatprep.subr.bf16.mxu0 0
        %695 = vmatpush1.bf16.msra.mxu0 0
        %696 = vmatprep.subr.bf16.mxu0 0
        %697 = vmatpush1.bf16.msra.mxu0 0
        %698 = vmatprep.subr.bf16.mxu0 0
        %699 = vmatpush1.bf16.msra.mxu0 0
        %700 = vmatprep.subr.bf16.mxu0 0
        %701 = vmatpush1.bf16.msra.mxu0 0
        %702 = vmatprep.subr.bf16.mxu0 0
        %703 = vmatpush1.bf16.msra.mxu0 0
        %704 = vmatprep.subr.bf16.mxu0 0
        %705 = vmatpush1.bf16.msra.mxu0 0
        %706 = vmatprep.subr.bf16.mxu0 0
        %707 = vmatpush1.bf16.msra.mxu0 0
        %708 = vmatprep.subr.bf16.mxu0 0
        %709 = vmatpush1.bf16.msra.mxu0 0
        %710 = vmatprep.subr.bf16.mxu0 0
        %711 = vmatpush1.bf16.msra.mxu0 0
        %712 = vmatprep.mubr.bf16.mxu0 0
        %713 = vmatmul.mubr.bf16.gmra.mrb[0].mxu0 %v473
        %v714 = vpop.f32.mrb[0].mxu0
        %v715 = vadd.f32 0.0, %v714
        %v716 = vpop.f32.mrb[0].mxu0
        %v717 = vadd.f32 0.0, %v716
        %v718 = vpop.f32.mrb[0].mxu0
        %v719 = vpop.f32.mrb[0].mxu0
        %720 = vdwg.mxu0
        %721 = vmatprep.subr.bf16.mxu0 %v420
        %722 = vmatpush1.bf16.msra.mxu0 %v419
        %723 = vmatprep.subr.bf16.mxu0 %v436
        %724 = vmatpush1.bf16.msra.mxu0 %v435
        %725 = vmatprep.subr.bf16.mxu0 0
        %726 = vmatpush1.bf16.msra.mxu0 0
        %727 = vmatprep.subr.bf16.mxu0 0
        %728 = vmatpush1.bf16.msra.mxu0 0
        %729 = vmatprep.subr.bf16.mxu0 0
        %730 = vmatpush1.bf16.msra.mxu0 0
        %731 = vmatprep.subr.bf16.mxu0 0
        %732 = vmatpush1.bf16.msra.mxu0 0
        %733 = vmatprep.subr.bf16.mxu0 0
        %734 = vmatpush1.bf16.msra.mxu0 0
        %735 = vmatprep.subr.bf16.mxu0 0
        %736 = vmatpush1.bf16.msra.mxu0 0
        %737 = vmatprep.subr.bf16.mxu0 0
        %738 = vmatpush1.bf16.msra.mxu0 0
        %739 = vmatprep.subr.bf16.mxu0 0
        %740 = vmatpush1.bf16.msra.mxu0 0
        %741 = vmatprep.subr.bf16.mxu0 0
        %742 = vmatpush1.bf16.msra.mxu0 0
        %743 = vmatprep.subr.bf16.mxu0 0
        %744 = vmatpush1.bf16.msra.mxu0 0
        %745 = vmatprep.subr.bf16.mxu0 0
        %746 = vmatpush1.bf16.msra.mxu0 0
        %747 = vmatprep.subr.bf16.mxu0 0
        %748 = vmatpush1.bf16.msra.mxu0 0
        %749 = vmatprep.subr.bf16.mxu0 0
        %750 = vmatpush1.bf16.msra.mxu0 0
        %751 = vmatprep.subr.bf16.mxu0 0
        %752 = vmatpush1.bf16.msra.mxu0 0
        %753 = vmatprep.mubr.bf16.mxu0 0
        %754 = vmatmul.mubr.bf16.gmra.mrb[0].mxu0 %v473
        %v755 = vpop.f32.mrb[0].mxu0
        %v756 = vadd.f32 0.0, %v755
        %v757 = vpop.f32.mrb[0].mxu0
        %v758 = vadd.f32 0.0, %v757
        %v759 = vpop.f32.mrb[0].mxu0
        %v760 = vpop.f32.mrb[0].mxu0
        %761 = vdwg.mxu0
        %762 = vmatprep.subr.bf16.mxu0 %v422
        %763 = vmatpush1.bf16.msra.mxu0 %v421
        %764 = vmatprep.subr.bf16.mxu0 %v438
        %765 = vmatpush1.bf16.msra.mxu0 %v437
        %766 = vmatprep.subr.bf16.mxu0 0
        %767 = vmatpush1.bf16.msra.mxu0 0
        %768 = vmatprep.subr.bf16.mxu0 0
        %769 = vmatpush1.bf16.msra.mxu0 0
        %770 = vmatprep.subr.bf16.mxu0 0
        %771 = vmatpush1.bf16.msra.mxu0 0
        %772 = vmatprep.subr.bf16.mxu0 0
        %773 = vmatpush1.bf16.msra.mxu0 0
        %774 = vmatprep.subr.bf16.mxu0 0
        %775 = vmatpush1.bf16.msra.mxu0 0
        %776 = vmatprep.subr.bf16.mxu0 0
        %777 = vmatpush1.bf16.msra.mxu0 0
        %778 = vmatprep.subr.bf16.mxu0 0
        %779 = vmatpush1.bf16.msra.mxu0 0
        %780 = vmatprep.subr.bf16.mxu0 0
        %781 = vmatpush1.bf16.msra.mxu0 0
        %782 = vmatprep.subr.bf16.mxu0 0
        %783 = vmatpush1.bf16.msra.mxu0 0
        %784 = vmatprep.subr.bf16.mxu0 0
        %785 = vmatpush1.bf16.msra.mxu0 0
        %786 = vmatprep.subr.bf16.mxu0 0
        %787 = vmatpush1.bf16.msra.mxu0 0
        %788 = vmatprep.subr.bf16.mxu0 0
        %789 = vmatpush1.bf16.msra.mxu0 0
        %790 = vmatprep.subr.bf16.mxu0 0
        %791 = vmatpush1.bf16.msra.mxu0 0
        %792 = vmatprep.subr.bf16.mxu0 0
        %793 = vmatpush1.bf16.msra.mxu0 0
        %794 = vmatprep.mubr.bf16.mxu0 0
        %795 = vmatmul.mubr.bf16.gmra.mrb[0].mxu0 %v473
        %v796 = vpop.f32.mrb[0].mxu0
        %v797 = vadd.f32 0.0, %v796
        %v798 = vpop.f32.mrb[0].mxu0
        %v799 = vadd.f32 0.0, %v798
        %v800 = vpop.f32.mrb[0].mxu0
        %v801 = vpop.f32.mrb[0].mxu0
        %802 = vdwg.mxu0
        %v819 = vcombine.low %v510, %v512
        %v820 = vcombine.low %v551, %v553
        %v822 = vunpack.c.l.s4 1983009808
        %v823 = vunpack.c.0.s8 %v822
        %v824 = vlaneseq
        %v825 = vshrl.u32 %v824, 7
        %v826 = vsub.s32 %v823, %v825
        %v827 = vrot.slane %v819, %v826
        %v829 = vunpack.c.l.s4 1983009808
        %v830 = vunpack.c.0.s8 %v829
        %v831 = vlaneseq
        %v832 = vshrl.u32 %v831, 7
        %v833 = vsub.s32 %v830, %v832
        %v834 = vrot.slane %v820, %v833
        %v835 = vcombine.low %v827, %v834
        %v836 = vcombine.low %v592, %v594
        %v837 = vcombine.low %v633, %v635
        %v839 = vunpack.c.l.s4 1983009808
        %v840 = vunpack.c.0.s8 %v839
        %v841 = vlaneseq
        %v842 = vshrl.u32 %v841, 7
        %v843 = vsub.s32 %v840, %v842
        %v844 = vrot.slane %v836, %v843
        %v846 = vunpack.c.l.s4 1983009808
        %v847 = vunpack.c.0.s8 %v846
        %v848 = vlaneseq
        %v849 = vshrl.u32 %v848, 7
        %v850 = vsub.s32 %v847, %v849
        %v851 = vrot.slane %v837, %v850
        %v852 = vcombine.low %v844, %v851
        %v853 = vcombine.low %v674, %v676
        %v854 = vcombine.low %v715, %v717
        %v856 = vunpack.c.l.s4 1983009808
        %v857 = vunpack.c.0.s8 %v856
        %v858 = vlaneseq
        %v859 = vshrl.u32 %v858, 7
        %v860 = vsub.s32 %v857, %v859
        %v861 = vrot.slane %v853, %v860
        %v863 = vunpack.c.l.s4 1983009808
        %v864 = vunpack.c.0.s8 %v863
        %v865 = vlaneseq
        %v866 = vshrl.u32 %v865, 7
        %v867 = vsub.s32 %v864, %v866
        %v868 = vrot.slane %v854, %v867
        %v869 = vcombine.low %v861, %v868
        %v870 = vcombine.low %v756, %v758
        %v871 = vcombine.low %v797, %v799
        %v873 = vunpack.c.l.s4 1983009808
        %v874 = vunpack.c.0.s8 %v873
        %v875 = vlaneseq
        %v876 = vshrl.u32 %v875, 7
        %v877 = vsub.s32 %v874, %v876
        %v878 = vrot.slane %v870, %v877
        %v880 = vunpack.c.l.s4 1983009808
        %v881 = vunpack.c.0.s8 %v880
        %v882 = vlaneseq
        %v883 = vshrl.u32 %v882, 7
        %v884 = vsub.s32 %v881, %v883
        %v885 = vrot.slane %v871, %v884
        %v886 = vcombine.low %v878, %v885
        %v891 = vadd.f32 %v274, %v835
        %v892 = vadd.f32 %v275, %v852
        %v893 = vadd.f32 %v276, %v869
        %v894 = vadd.f32 %v277, %v886
        %895 = vst [vmem:[%s260] sm:$0xff] %v891
        %896 = vst [vmem:[%s260 + $0x8] sm:$0xff] %v892
        %897 = vst [vmem:[%s260 + $0x10] sm:$0xff] %v893
        %898 = vst [vmem:[%s260 + $0x18] sm:$0xff] %v894
        // Predicated region
        $region49: #{tpu_custom_call.1} parent=31 // pred_check
          %p899 = pneg %p266
        $region50: #{tpu_custom_call.1} parent=31 // pred_check_branch
          %901 = sbr.rel (%p899) target = $region52
        $region51: #{tpu_custom_call.1} parent=31 // pred_region
          %v902 = vld [vmem:[%s260] sm:$0xff]
          %v903 = vld [vmem:[%s260 + $0x8] sm:$0xff]
          %v904 = vld [vmem:[%s260 + $0x10] sm:$0xff]
          %v905 = vld [vmem:[%s260 + $0x18] sm:$0xff]
          %v906 = vld [vmem:[%s233] sm:$0xff]
          %v907 = vld [vmem:[%s233 + $0x8] sm:$0xff]
          %v910 = vlaneseq
          %v911 = vshrl.u32 %v910, 7
          %v912 = vsub.s32 0, %v911
          %v913 = vrot.slane %v906, %v912
          %v914 = vlaneseq
          %v915 = vshrl.u32 %v914, 7
          %v916 = vsub.s32 1, %v915
          %v917 = vrot.slane %v906, %v916
          %v918 = vlaneseq
          %v919 = vshrl.u32 %v918, 7
          %v920 = vsub.s32 2, %v919
          %v921 = vrot.slane %v906, %v920
          %v922 = vlaneseq
          %v923 = vshrl.u32 %v922, 7
          %v924 = vsub.s32 3, %v923
          %v925 = vrot.slane %v906, %v924
          %v926 = vlaneseq
          %v927 = vshrl.u32 %v926, 7
          %v928 = vsub.s32 4, %v927
          %v929 = vrot.slane %v906, %v928
          %v930 = vlaneseq
          %v931 = vshrl.u32 %v930, 7
          %v932 = vsub.s32 5, %v931
          %v933 = vrot.slane %v906, %v932
          %v934 = vlaneseq
          %v935 = vshrl.u32 %v934, 7
          %v936 = vsub.s32 6, %v935
          %v937 = vrot.slane %v906, %v936
          %v938 = vlaneseq
          %v939 = vshrl.u32 %v938, 7
          %v940 = vsub.s32 7, %v939
          %v941 = vrot.slane %v906, %v940
          %v942 = vlaneseq
          %v943 = vshrl.u32 %v942, 7
          %v944 = vsub.s32 0, %v943
          %v945 = vrot.slane %v907, %v944
          %v946 = vlaneseq
          %v947 = vshrl.u32 %v946, 7
          %v948 = vsub.s32 1, %v947
          %v949 = vrot.slane %v907, %v948
          %v950 = vlaneseq
          %v951 = vshrl.u32 %v950, 7
          %v952 = vsub.s32 2, %v951
          %v953 = vrot.slane %v907, %v952
          %v954 = vlaneseq
          %v955 = vshrl.u32 %v954, 7
          %v956 = vsub.s32 3, %v955
          %v957 = vrot.slane %v907, %v956
          %v958 = vlaneseq
          %v959 = vshrl.u32 %v958, 7
          %v960 = vsub.s32 4, %v959
          %v961 = vrot.slane %v907, %v960
          %v962 = vlaneseq
          %v963 = vshrl.u32 %v962, 7
          %v964 = vsub.s32 5, %v963
          %v965 = vrot.slane %v907, %v964
          %v966 = vlaneseq
          %v967 = vshrl.u32 %v966, 7
          %v968 = vsub.s32 6, %v967
          %v969 = vrot.slane %v907, %v968
          %v970 = vlaneseq
          %v971 = vshrl.u32 %v970, 7
          %v972 = vsub.s32 7, %v971
          %v973 = vrot.slane %v907, %v972
          %v974 = vcombine.low %v913, %v917
          %v975 = vcombine.low %v921, %v925
          %v977 = vunpack.c.l.s4 1983009808
          %v978 = vunpack.c.0.s8 %v977
          %v979 = vlaneseq
          %v980 = vshrl.u32 %v979, 7
          %v981 = vsub.s32 %v978, %v980
          %v982 = vrot.slane %v974, %v981
          %v984 = vunpack.c.l.s4 1983009808
          %v985 = vunpack.c.0.s8 %v984
          %v986 = vlaneseq
          %v987 = vshrl.u32 %v986, 7
          %v988 = vsub.s32 %v985, %v987
          %v989 = vrot.slane %v975, %v988
          %v990 = vcombine.low %v982, %v989
          %v991 = vcombine.low %v929, %v933
          %v992 = vcombine.low %v937, %v941
          %v994 = vunpack.c.l.s4 1983009808
          %v995 = vunpack.c.0.s8 %v994
          %v996 = vlaneseq
          %v997 = vshrl.u32 %v996, 7
          %v998 = vsub.s32 %v995, %v997
          %v999 = vrot.slane %v991, %v998
          %v1001 = vunpack.c.l.s4 1983009808
          %v1002 = vunpack.c.0.s8 %v1001
          %v1003 = vlaneseq
          %v1004 = vshrl.u32 %v1003, 7
          %v1005 = vsub.s32 %v1002, %v1004
          %v1006 = vrot.slane %v992, %v1005
          %v1007 = vcombine.low %v999, %v1006
          %v1008 = vcombine.low %v945, %v949
          %v1009 = vcombine.low %v953, %v957
          %v1011 = vunpack.c.l.s4 1983009808
          %v1012 = vunpack.c.0.s8 %v1011
          %v1013 = vlaneseq
          %v1014 = vshrl.u32 %v1013, 7
          %v1015 = vsub.s32 %v1012, %v1014
          %v1016 = vrot.slane %v1008, %v1015
          %v1018 = vunpack.c.l.s4 1983009808
          %v1019 = vunpack.c.0.s8 %v1018
          %v1020 = vlaneseq
          %v1021 = vshrl.u32 %v1020, 7
          %v1022 = vsub.s32 %v1019, %v1021
          %v1023 = vrot.slane %v1009, %v1022
          %v1024 = vcombine.low %v1016, %v1023
          %v1025 = vcombine.low %v961, %v965
          %v1026 = vcombine.low %v969, %v973
          %v1028 = vunpack.c.l.s4 1983009808
          %v1029 = vunpack.c.0.s8 %v1028
          %v1030 = vlaneseq
          %v1031 = vshrl.u32 %v1030, 7
          %v1032 = vsub.s32 %v1029, %v1031
          %v1033 = vrot.slane %v1025, %v1032
          %v1035 = vunpack.c.l.s4 1983009808
          %v1036 = vunpack.c.0.s8 %v1035
          %v1037 = vlaneseq
          %v1038 = vshrl.u32 %v1037, 7
          %v1039 = vsub.s32 %v1036, %v1038
          %v1040 = vrot.slane %v1026, %v1039
          %v1041 = vcombine.low %v1033, %v1040
          %v1046 = vadd.f32 %v902, %v990
          %v1047 = vadd.f32 %v903, %v1007
          %v1048 = vadd.f32 %v904, %v1024
          %v1049 = vadd.f32 %v905, %v1041
          %v1050 = vmax.f32 %v1046, 0.0
          %v1051 = vmax.f32 %v1047, 0.0
          %v1052 = vmax.f32 %v1048, 0.0
          %v1053 = vmax.f32 %v1049, 0.0
          %1054 = vst [vmem:[%s260] sm:$0xff] %v1050
          %1055 = vst [vmem:[%s260 + $0x8] sm:$0xff] %v1051
          %1056 = vst [vmem:[%s260 + $0x10] sm:$0xff] %v1052
          %1057 = vst [vmem:[%s260 + $0x18] sm:$0xff] %v1053
        $region52: #{tpu_custom_call.1} parent=31 // pred_fallthru
          _
        %s1058 = sand.u32 %s121, 1
        %s1059 = scalar_lea.sflag [#allocation4], %s1058
        %s1060 = sand.u32 %s121, 1
        %s1061 = smul.addr %s1060, 32
        %s1062 = scalar_lea.vmem [#allocation8], %s1061
        // Predicated region
        $region53: #{tpu_custom_call.1} parent=31 // pred_check
          %p1063 = pneg %p131
        $region54: #{tpu_custom_call.1} parent=31 // pred_check_branch
          %1065 = sbr.rel (%p1063) target = $region56
        $region55: #{tpu_custom_call.1} parent=31 // pred_region
          %s1066 = smul.u32 16, %s25
          %s1068 = ssub.s32 512, 512
          %1069 = vsyncadd %s1059, %s1068
          %s1070 = smul.addr %s1066, 32
          %s1071 = scalar_lea.hbm %s3, %s1070
          %s1073 = sshll.u32 %s1062, 4
          %s1074 = int_to_ptr.vmem [resolvable:$true] %s1073
          %1076 = dma.vmem_to_hbm [thread:$0]  %s1074, 512, %s1071, %s1059
        $region56: #{tpu_custom_call.1} parent=31 // pred_fallthru
          _
      $region32: #{tpu_custom_call.1} parent=5 // pred_fallthru
        _
      %p1077 = scmp.le.s32.totalorder 2, %s16
      // Predicated region
      $region57: #{tpu_custom_call.1} parent=5 // pred_check
        %p1078 = pneg %p1077
      $region58: #{tpu_custom_call.1} parent=5 // pred_check_branch
        %1080 = sbr.rel (%p1078) target = $region60
      $region59: #{tpu_custom_call.1} parent=5 // pred_region
        %s1081 = ssub.s32 %s16, 2
        // Predicated region
        $region61: #{tpu_custom_call.1} parent=59 // pred_check
          %p1082 = pneg %p137
        $region62: #{tpu_custom_call.1} parent=59 // pred_check_branch
          %1084 = sbr.rel (%p1082) target = $region64
        $region63: #{tpu_custom_call.1} parent=59 // pred_region
          %s1085 = sand.u32 %s122, 1
          %s1086 = scalar_lea.sflag [#allocation4], %s1085
          %s1087 = sand.u32 %s122, 1
          %s1088 = smul.addr %s1087, 32
          %s1089 = scalar_lea.vmem [#allocation8], %s1088
          %1090 = dma.done %s1086, 512
        $region64: #{tpu_custom_call.1} parent=59 // pred_fallthru
          _
      $region60: #{tpu_custom_call.1} parent=5 // pred_fallthru
        _
    $region6: #{tpu_custom_call.1} parent=1 // loop_footer
      %s20 = sadd.s32 1, %s16
    $region7: #{tpu_custom_call.1} parent=1 // loop_footer_branch
      %15 = sbr.rel target = $region3
    $region8: #{tpu_custom_call.1} parent=1 // loop_exit
      _
    %1091 = vsyncpa [#allocation3], 1
    %s1092 = scalar_lea.sflag [#allocation3], 1
    %1093 = vsyncpa %s1092, 1
    %1094 = vsyncpa [#allocation6], 1
    %s1095 = scalar_lea.sflag [#allocation6], 1
    %1096 = vsyncpa %s1095, 1
    %1097 = vsyncpa [#allocation4], 1
    %s1098 = scalar_lea.sflag [#allocation4], 1
    %1099 = vsyncpa %s1098, 1

</llo_original>
